<compile_context>
chip_gen: v6e
topology: v6e:2x2x1
jax: 0.10.0
libtpu: 0.0.40
codegen_flags: <defaults>
</compile_context>

<pallas_src>
import functools
import math

import jax
import jax.numpy as jnp
from jax.experimental import pallas as pl
from jax.experimental.pallas import tpu as pltpu


def _learnable_sigmoid_kernel(x_ref, slope_ref, o_ref, *, beta):
    # x_ref:     (tile_rows, L)
    # slope_ref: (1, L) -> broadcasts over the sublane (row) axis
    x = x_ref[...].astype(jnp.float32)
    s = slope_ref[...].astype(jnp.float32)
    y = jax.nn.sigmoid(s * x)
    if beta != 1.0:              # trace-time check: skip the mul when beta == 1
        y = beta * y
    o_ref[...] = y.astype(o_ref.dtype)


def learnable_sigmoid(x, slope, beta=1.0, *, block_bytes=4 * 1024 * 1024):
    """y = beta * sigmoid(slope * x); slope (in_features,) broadcast over leading dims."""
    in_features = slope.shape[-1]
    assert x.shape[-1] == in_features

    orig_shape = x.shape
    dtype = x.dtype
    dtype_bytes = jnp.dtype(dtype).itemsize
    total = x.size
    lane = 128

    # ---- choose a lane-dense row width L (multiple of in_features, ideally of 128) ----
    L = in_features
    if L % lane != 0:
        cand = L * lane // math.gcd(L, lane)   # lcm(in_features, 128)
        if total % cand == 0:
            L = cand
    while L < 2048 and total % (2 * L) == 0:   # widen further while it still tiles evenly
        L *= 2

    rows = total // L
    x2 = x.reshape(rows, L)
    reps = L // in_features
    slope_row = (jnp.tile(slope, reps) if reps > 1 else slope).reshape(1, L)

    # ---- row tile sized by byte budget (amortise per-grid-step overhead) ----
    row_align = 16 if dtype_bytes < 4 else 8
    budget_rows = max(1, block_bytes // (L * dtype_bytes))
    if budget_rows >= rows:
        tile_rows = rows                                   # one block; full-dim block is legal
    else:
        tile_rows = max(row_align, (budget_rows // row_align) * row_align)
        tile_rows = min(tile_rows, rows)

    grid = (pl.cdiv(rows, tile_rows),)   # no padding; boundary block is clipped/masked

    block_actual = tile_rows * L * dtype_bytes
    # in + out, double-buffered, plus slack; explicit so v5e's 16 MiB scoped default
    # doesn't bite, capped so it also fits v7x's 64 MiB physical VMEM.
    vmem_limit = max(32 << 20, min(4 * block_actual + (4 << 20), 48 << 20))

    out = pl.pallas_call(
        functools.partial(_learnable_sigmoid_kernel, beta=float(beta)),
        out_shape=jax.ShapeDtypeStruct((rows, L), dtype),
        grid=grid,
        in_specs=[
            pl.BlockSpec((tile_rows, L), lambda i: (i, 0)),
            pl.BlockSpec((1, L), lambda i: (0, 0)),
        ],
        out_specs=pl.BlockSpec((tile_rows, L), lambda i: (i, 0)),
        compiler_params=pltpu.CompilerParams(
            dimension_semantics=("parallel",),   # lets v7x megacore shard the row axis
            vmem_limit_bytes=int(vmem_limit),
        ),
    )(x2, slope_row)

    return out.reshape(orig_shape)


if __name__ == "__main__":
    key = jax.random.PRNGKey(0)

    # Case 1: shapes implied by the module (batch=2, seq=8, in_features=32).
    B, T, F = 2, 8, 32
    beta = 1.0
    x = jax.random.normal(key, (B, T, F), dtype=jnp.float32)
    slope = jnp.ones((F,), dtype=jnp.float32)   # matches nn.Parameter(torch.ones(in_features))

    y = learnable_sigmoid(x, slope, beta=beta)
    y = jax.block_until_ready(y)
    y_ref = beta * jax.nn.sigmoid(slope * x)
    assert y.shape == x.shape
    assert jnp.allclose(y, y_ref, atol=1e-6, rtol=1e-6)

    # Case 2: non-trivial beta + forced multi-block cdiv grid with a clipped
    # boundary block (tiny block_bytes) to exercise the no-padding path.
    x2 = jax.random.normal(jax.random.PRNGKey(1), (2, 100, F), dtype=jnp.float32)
    slope2 = jax.random.normal(jax.random.PRNGKey(2), (F,), dtype=jnp.float32)
    beta2 = 2.0
    y2 = learnable_sigmoid(x2, slope2, beta=beta2, block_bytes=4096)
    y2 = jax.block_until_ready(y2)
    y2_ref = beta2 * jax.nn.sigmoid(slope2 * x2)
    assert y2.shape == x2.shape
    assert jnp.allclose(y2, y2_ref, atol=1e-6, rtol=1e-6)

    # Case 3: in_features that can't be widened to a 128-multiple row width
    # (odd leading-dim product) -> narrow-L masked-store fallback path.
    F3 = 48
    x3 = jax.random.normal(jax.random.PRNGKey(3), (3, 7, F3), dtype=jnp.float32)
    slope3 = jax.random.normal(jax.random.PRNGKey(4), (F3,), dtype=jnp.float32)
    y3 = learnable_sigmoid(x3, slope3, beta=0.5)
    y3 = jax.block_until_ready(y3)
    y3_ref = 0.5 * jax.nn.sigmoid(slope3 * x3)
    assert y3.shape == x3.shape
    assert jnp.allclose(y3, y3_ref, atol=1e-6, rtol=1e-6)

    print("KERNEL_OK")
</pallas_src>

<mosaic_0001>
module attributes {stable_mosaic.version = 11 : i64} {
  func.func @_learnable_sigmoid_kernel(%arg0: i32, %arg1: memref<1x512xf32, #tpu.memory_space<vmem>>, %arg2: memref<1x512xf32, #tpu.memory_space<vmem>>, %arg3: memref<1x512xf32, #tpu.memory_space<vmem>>) attributes {dimension_semantics = [#tpu.dimension_semantics<parallel>], iteration_bounds = array<i64: 1>, scalar_prefetch = 0 : i64, scratch_operands = 0 : i64, tpu.core_type = #tpu.core_type<tc>, window_params = [{transform_indices = @transform_0, window_bounds = array<i64: 1, 512>}, {pipeline_mode = #tpu.pipeline_mode<synchronous>, transform_indices = @transform_1, window_bounds = array<i64: 1, 512>}, {transform_indices = @transform_2, window_bounds = array<i64: 1, 512>}]} {
    %c0 = arith.constant 0 : index
    %c0_0 = arith.constant 0 : index
    %0 = vector.load %arg1[%c0, %c0_0] : memref<1x512xf32, #tpu.memory_space<vmem>>, vector<1x512xf32>
    %c0_1 = arith.constant 0 : index
    %c0_2 = arith.constant 0 : index
    %1 = vector.load %arg2[%c0_1, %c0_2] : memref<1x512xf32, #tpu.memory_space<vmem>>, vector<1x512xf32>
    %2 = arith.mulf %1, %0 : vector<1x512xf32>
    %3 = arith.negf %2 : vector<1x512xf32>
    %4 = math.exp %3 : vector<1x512xf32>
    %cst = arith.constant 1.000000e+00 : f32
    %5 = vector.broadcast %cst : f32 to vector<1x512xf32>
    %6 = arith.addf %5, %4 : vector<1x512xf32>
    %7 = arith.divf %5, %6 : vector<1x512xf32>
    %c0_3 = arith.constant 0 : index
    %c0_4 = arith.constant 0 : index
    %8 = vector.load %arg3[%c0_3, %c0_4] : memref<1x512xf32, #tpu.memory_space<vmem>>, vector<1x512xf32>
    tpu.vector_store %arg3[%c0_3, %c0_4], %7 {strides = array<i32>} : memref<1x512xf32, #tpu.memory_space<vmem>>, vector<1x512xf32>,
    return
  }
  func.func @transform_0(%arg0: i32) -> (i32, i32) {
    %c0_i32 = arith.constant 0 : i32
    %c0_i32_0 = arith.constant 0 : i32
    return %arg0, %c0_i32 : i32, i32
  }
  func.func @transform_1(%arg0: i32) -> (i32, i32) {
    %c0_i32 = arith.constant 0 : i32
    %c0_i32_0 = arith.constant 0 : i32
    %c0_i32_1 = arith.constant 0 : i32
    return %c0_i32, %c0_i32_0 : i32, i32
  }
  func.func @transform_2(%arg0: i32) -> (i32, i32) {
    %c0_i32 = arith.constant 0 : i32
    %c0_i32_0 = arith.constant 0 : i32
    return %arg0, %c0_i32 : i32, i32
  }
}

</mosaic_0001>

<llo_original>
// kernel: tpu_custom_call.1
$region0: #{tpu_custom_call.1}
  #allocation0 [shape = 'u32[]', space=smem, size = 0x4, offset = 0x4, fixed_abs, tag = 'smem constant byte address 0x4 - core index']
  #allocation1 [shape = 'u32[144,128]{1,0:T(1,128)}', space=vmem, size = 0x12000, scoped, tag = 'internal scratch']
  %s0 = inlined_call_operand.hbm [shape: f32[1,512], index: 0, kind: input, shape index: {}]
  %s1 = inlined_call_operand.hbm [shape: f32[1,512], index: 1, kind: input, shape index: {}]
  %s2 = inlined_call_operand.hbm [shape: f32[1,512], index: 2, kind: output, shape index: {}]
  %s3 = sld [smem:[#allocation0]]
  $region26: #{tpu_custom_call.1} parent=0
    _
  %s5 = ssub.s32 1, %s3
  %s6 = scalar_select 0, %s5, %s3
  $region1: #{tpu_custom_call.1} parent=0
    #allocation2 [shape = 'u8[2048]{0}', space=vmem, size = 0x800, scoped, tag = 'input window, operand 0, single buffered']
    #allocation3 [shape = 's32[1]{0}', space=sflag, size = 0x4, scoped, tag = 'scoped memory for tpu_custom_call.1']
    #allocation4 [shape = 's32[1]{0}', space=sflag, size = 0x4, scoped, tag = 'scoped memory for tpu_custom_call.1']
    #allocation5 [shape = 'u8[2048]{0}', space=vmem, size = 0x800, scoped, tag = 'input window, operand 1, single buffered']
    #allocation6 [shape = 's32[1]{0}', space=sflag, size = 0x4, scoped, tag = 'scoped memory for tpu_custom_call.1']
    #allocation7 [shape = 'u8[2048]{0}', space=vmem, size = 0x800, scoped, tag = 'output window, operand 0, single buffered']
    %7 = vsyncpa [#allocation3], 0
    %8 = vsyncpa [#allocation6], 0
    %9 = vsyncpa [#allocation4], 0
    // Predicated region
    $region2: #{tpu_custom_call.1} parent=1 // pred_check
      _
    $region3: #{tpu_custom_call.1} parent=1 // pred_check_branch
      %11 = sbr.rel (0) target = $region5
    $region4: #{tpu_custom_call.1} parent=1 // pred_region
      %s13 = ssub.s32 64, 64
      %14 = vsyncadd [#allocation3], %s13
      %s16 = sshll.u32 [#allocation2], 4
      %s17 = int_to_ptr.vmem [resolvable:$true] %s16
      %19 = dma.hbm_to_vmem [thread:$0]  %s0, 64, %s17, [#allocation3]
    $region5: #{tpu_custom_call.1} parent=1 // pred_fallthru
      _
    // Predicated region
    $region6: #{tpu_custom_call.1} parent=1 // pred_check
      _
    $region7: #{tpu_custom_call.1} parent=1 // pred_check_branch
      %21 = sbr.rel (0) target = $region9
    $region8: #{tpu_custom_call.1} parent=1 // pred_region
      %s23 = ssub.s32 64, 64
      %24 = vsyncadd [#allocation6], %s23
      %s26 = sshll.u32 [#allocation5], 4
      %s27 = int_to_ptr.vmem [resolvable:$true] %s26
      %29 = dma.hbm_to_vmem [thread:$0]  %s1, 64, %s27, [#allocation6]
    $region9: #{tpu_custom_call.1} parent=1 // pred_fallthru
      _
    // Predicated region
    $region10: #{tpu_custom_call.1} parent=1 // pred_check
      _
    $region11: #{tpu_custom_call.1} parent=1 // pred_check_branch
      %31 = sbr.rel (0) target = $region13
    $region12: #{tpu_custom_call.1} parent=1 // pred_region
      %32 = dma.done [#allocation3], 64
    $region13: #{tpu_custom_call.1} parent=1 // pred_fallthru
      _
    // Predicated region
    $region14: #{tpu_custom_call.1} parent=1 // pred_check
      _
    $region15: #{tpu_custom_call.1} parent=1 // pred_check_branch
      %34 = sbr.rel (0) target = $region17
    $region16: #{tpu_custom_call.1} parent=1 // pred_region
      %35 = dma.done [#allocation6], 64
    $region17: #{tpu_custom_call.1} parent=1 // pred_fallthru
      _
    %v36 = vld [vmem:[#allocation2] sm:$0xf]
    %v37 = vld [vmem:[#allocation5] sm:$0xf]
    %v38 = vmul.f32 %v37, %v36
    %v39 = vxor.u32 %v38, 2147483648
    %v40 = vmul.f32 %v39, 1.442695
    %v41 = vpow.pop %v40
    %v42 = vadd.f32 %v41, 1.0
    %v43 = vrcp.pop %v42
    %v44 = vmul.f32 1.0, %v43
    %v45 = vlaneseq
    %vm46 = vcmp.ge.s32.totalorder %v45, 0
    %vm47 = vcmp.lt.s32.totalorder %v45, 512
    %vm48 = vmand %vm46, %vm47
    %49 = vst.msk [vmem:[#allocation7] sm:$0xf] %vm48, %v44
    // Predicated region
    $region18: #{tpu_custom_call.1} parent=1 // pred_check
      _
    $region19: #{tpu_custom_call.1} parent=1 // pred_check_branch
      %51 = sbr.rel (0) target = $region21
    $region20: #{tpu_custom_call.1} parent=1 // pred_region
      %s53 = ssub.s32 64, 64
      %54 = vsyncadd [#allocation4], %s53
      %s56 = sshll.u32 [#allocation7], 4
      %s57 = int_to_ptr.vmem [resolvable:$true] %s56
      %59 = dma.vmem_to_hbm [thread:$0]  %s57, 64, %s2, [#allocation4]
    $region21: #{tpu_custom_call.1} parent=1 // pred_fallthru
      _
    // Predicated region
    $region22: #{tpu_custom_call.1} parent=1 // pred_check
      _
    $region23: #{tpu_custom_call.1} parent=1 // pred_check_branch
      %61 = sbr.rel (0) target = $region25
    $region24: #{tpu_custom_call.1} parent=1 // pred_region
      %62 = dma.done [#allocation4], 64
    $region25: #{tpu_custom_call.1} parent=1 // pred_fallthru
      _
    %63 = vsyncpa [#allocation3], 1
    %64 = vsyncpa [#allocation6], 1
    %65 = vsyncpa [#allocation4], 1

</llo_original>
